<compile_context>
chip_gen: v6e
topology: v6e:2x2x1
jax: 0.10.0
libtpu: 0.0.40
codegen_flags: <defaults>
</compile_context>

<pallas_src>
import math

import jax
import jax.numpy as jnp
from jax.experimental import pallas as pl
from jax.experimental.pallas import tpu as pltpu

_UNROLL = 8  # rows per unrolled gather group (tiles are multiples of 8 rows)


def _round_up(x: int, m: int) -> int:
    return ((x + m - 1) // m) * m


# ---------------------------------------------------------------------------
# Fast path: tables resident in VMEM, gather via in-kernel dynamic row loads.
# ---------------------------------------------------------------------------
def _transe_vmem_kernel(h_idx, r_idx, t_idx, ch_idx, cr_idx, ct_idx,  # SMEM
                        ent_ref, rel_ref,                              # VMEM tables
                        out_ref,                                       # (tm, 2)
                        d_buf, cd_buf):                                # (tm, Dp) scratch
    tm = out_ref.shape[0]
    base = pl.program_id(0) * tm

    @pl.loop(0, tm // _UNROLL)
    def _gather(blk):
        r0 = pl.multiple_of(blk * _UNROLL, _UNROLL)
        for j in range(_UNROLL):
            row = r0 + j
            b = base + row
            dst = pl.ds(row, 1)
            h = ent_ref[pl.ds(h_idx[b], 1), :]
            r = rel_ref[pl.ds(r_idx[b], 1), :]
            t = ent_ref[pl.ds(t_idx[b], 1), :]
            ch = ent_ref[pl.ds(ch_idx[b], 1), :]
            cr = rel_ref[pl.ds(cr_idx[b], 1), :]
            ct = ent_ref[pl.ds(ct_idx[b], 1), :]
            # Store only the differences: 2 scratch buffers instead of 6.
            d_buf[dst, :] = h + r - t
            cd_buf[dst, :] = ch + cr - ct

    d = d_buf[...]
    cd = cd_buf[...]
    out_ref[...] = jnp.concatenate(
        [jnp.sum(d * d, axis=1, keepdims=True),
         jnp.sum(cd * cd, axis=1, keepdims=True)], axis=1)


# ---------------------------------------------------------------------------
# Fallback path: tables stay in HBM, fused per-row DMA gather.
# ---------------------------------------------------------------------------
def _transe_hbm_kernel(h_idx, r_idx, t_idx, ch_idx, cr_idx, ct_idx,   # SMEM
                       ent_hbm, rel_hbm,                              # HBM (ANY)
                       out_ref,                                       # (tm, 2)
                       hb, rb, tb, chb, crb, ctb,                     # (tm, Dp) scratch
                       sem):                                          # DMA sems (6,)
    tm = out_ref.shape[0]
    base = pl.program_id(0) * tm

    # Fused gather: per-row DMA starts, partially unrolled so scalar index
    # loads / address math co-issue with the descriptor pushes.
    @pl.loop(0, tm // _UNROLL)
    def _start(blk):
        r0 = pl.multiple_of(blk * _UNROLL, _UNROLL)
        for j in range(_UNROLL):
            row = r0 + j
            b = base + row
            dst = pl.ds(row, 1)
            pltpu.make_async_copy(ent_hbm.at[pl.ds(h_idx[b], 1)], hb.at[dst], sem.at[0]).start()
            pltpu.make_async_copy(rel_hbm.at[pl.ds(r_idx[b], 1)], rb.at[dst], sem.at[1]).start()
            pltpu.make_async_copy(ent_hbm.at[pl.ds(t_idx[b], 1)], tb.at[dst], sem.at[2]).start()
            pltpu.make_async_copy(ent_hbm.at[pl.ds(ch_idx[b], 1)], chb.at[dst], sem.at[3]).start()
            pltpu.make_async_copy(rel_hbm.at[pl.ds(cr_idx[b], 1)], crb.at[dst], sem.at[4]).start()
            pltpu.make_async_copy(ent_hbm.at[pl.ds(ct_idx[b], 1)], ctb.at[dst], sem.at[5]).start()

    # ONE wait per stream per tile: DMA semaphores count bytes, so a single
    # full-tile-shaped descriptor (tm*Dp*4 bytes) is exactly equivalent to the
    # tm per-row waits of (1, Dp) each.  The src ref only provides a matching
    # shape/dtype for the byte count (same shape as every dst buffer).
    bufs = (hb, rb, tb, chb, crb, ctb)
    for s in range(6):
        pltpu.make_async_copy(bufs[s - 1], bufs[s], sem.at[s]).wait()

    d = hb[...] + rb[...] - tb[...]
    cd = chb[...] + crb[...] - ctb[...]
    out_ref[...] = jnp.concatenate(
        [jnp.sum(d * d, axis=1, keepdims=True),
         jnp.sum(cd * cd, axis=1, keepdims=True)], axis=1)


def transe_scores(entity_pad, relation_pad, batch, corrupt_batch, *,
                  max_tile=512, force_hbm_path=False):
    """Fused gather + TransE squared-L2 scores.

    entity_pad:   (E, Dp) f32, Dp % 128 == 0 (zero-padded embedding table)
    relation_pad: (R, Dp) f32
    batch, corrupt_batch: (B, 3) int triples (h, r, t)
    Returns (correct, corrupt), each (B,) f32.
    """
    B = batch.shape[0]
    E, Dp = entity_pad.shape
    R = relation_pad.shape[0]
    assert Dp % 128 == 0 and relation_pad.shape[1] == Dp

    # --- Generation-aware VMEM budget (v7x = 64 MiB/TC, v5e/v6e = 128 MiB). ---
    try:
        vmem_cap = int(pltpu.get_tpu_info().vmem_capacity_bytes)
    except Exception:
        vmem_cap = 64 * 2**20  # conservative (v7x per-TC VMEM)
    budget = int(vmem_cap * 0.7)  # leave headroom for pipeline buffers / internals

    f32_row = Dp * 4
    table_bytes = (E + R) * f32_row

    # Fast path if both padded tables fit (budget 2x for pipeline buffering of
    # the constant-index table blocks) plus a minimal scratch tile.
    min_scratch_fast = 2 * 8 * f32_row
    use_vmem_tables = (not force_hbm_path) and (2 * table_bytes + min_scratch_fast <= budget)

    if use_vmem_tables:
        rows_budget = (budget - 2 * table_bytes) // (2 * f32_row)   # 2 diff buffers
    else:
        rows_budget = budget // (6 * f32_row)                        # 6 gather buffers
    rows_budget = max(8, (rows_budget // 8) * 8)

    # --- Batch tiling: one tile for tiny batches; otherwise >= 2 tiles so the
    #     "parallel" batch axis can shard across both TensorCores on v7x. ---
    if B <= 256:
        tm = _round_up(B, 8)
    else:
        tm = _round_up((B + 1) // 2, 8)
    tm = min(tm, max_tile, rows_budget)
    tm = max(8, (tm // 8) * 8)
    b_pad = _round_up(B, tm)
    num_tiles = b_pad // tm

    def cols(tri):
        tri = tri.astype(jnp.int32)
        if b_pad != B:
            tri = jnp.pad(tri, ((0, b_pad - B), (0, 0)))  # padded rows gather row 0
        return tri[:, 0], tri[:, 1], tri[:, 2]

    h_idx, r_idx, t_idx = cols(batch)
    ch_idx, cr_idx, ct_idx = cols(corrupt_batch)

    out_shape = jax.ShapeDtypeStruct((b_pad, 2), jnp.float32)
    out_spec = pl.BlockSpec((tm, 2), lambda i, *_: (i, 0))

    if use_vmem_tables:
        needed = 2 * table_bytes + 2 * tm * f32_row + 4 * tm * 2 * 4
        grid_spec = pltpu.PrefetchScalarGridSpec(
            num_scalar_prefetch=6,
            grid=(num_tiles,),
            in_specs=[pl.BlockSpec((E, Dp), lambda i, *_: (0, 0)),   # entity table -> VMEM once
                      pl.BlockSpec((R, Dp), lambda i, *_: (0, 0))],  # relation table -> VMEM once
            out_specs=out_spec,
            scratch_shapes=[pltpu.VMEM((tm, Dp), jnp.float32)] * 2)
        kernel = _transe_vmem_kernel
    else:
        needed = 6 * tm * f32_row + 4 * tm * 2 * 4
        grid_spec = pltpu.PrefetchScalarGridSpec(
            num_scalar_prefetch=6,
            grid=(num_tiles,),
            in_specs=[pl.BlockSpec(memory_space=pl.ANY),     # entity table (HBM)
                      pl.BlockSpec(memory_space=pl.ANY)],    # relation table (HBM)
            out_specs=out_spec,
            scratch_shapes=[pltpu.VMEM((tm, Dp), jnp.float32)] * 6
                           + [pltpu.SemaphoreType.DMA((6,))])
        kernel = _transe_hbm_kernel

    vmem_limit = int(min(vmem_cap, max(16 * 2**20, needed + (needed >> 2) + (2 << 20))))

    out = pl.pallas_call(
        kernel,
        grid_spec=grid_spec,
        out_shape=out_shape,
        compiler_params=pltpu.CompilerParams(
            dimension_semantics=("parallel",),
            vmem_limit_bytes=vmem_limit),
    )(h_idx, r_idx, t_idx, ch_idx, cr_idx, ct_idx, entity_pad, relation_pad)

    return out[:B, 0], out[:B, 1]


class TransE:
    """JAX/Pallas port of the PyTorch TransE module (forward pass only)."""

    def __init__(self, entity_num, relation_num, emb_dimension, key):
        self.emb_dimension = emb_dimension
        bound = 6.0 / math.sqrt(emb_dimension)
        k_e, k_r = jax.random.split(key)
        ent = jax.random.uniform(
            k_e, (entity_num, emb_dimension), jnp.float32, -bound, bound)
        rel = jax.random.uniform(
            k_r, (relation_num, emb_dimension), jnp.float32, -bound, bound)
        # F.normalize(p=2, dim=1) with eps=1e-12, as in PyTorch defaults.
        eps = 1e-12
        ent = ent / jnp.maximum(jnp.linalg.norm(ent, axis=1, keepdims=True), eps)
        rel = rel / jnp.maximum(jnp.linalg.norm(rel, axis=1, keepdims=True), eps)
        self.entity_emb = ent
        self.relation_emb = rel
        # Lane-padded (D -> multiple of 128) copies used by the kernel.
        # Zero padding is exact for a sum-of-squares reduction.
        dp = _round_up(emb_dimension, 128)
        self.entity_emb_padded = jnp.pad(ent, ((0, 0), (0, dp - emb_dimension)))
        self.relation_emb_padded = jnp.pad(rel, ((0, 0), (0, dp - emb_dimension)))

    def forward(self, batch, corrupt_batch):
        # batch, corrupt_batch: int arrays of shape (B, 3) = (h, r, t) triples.
        return transe_scores(self.entity_emb_padded, self.relation_emb_padded,
                             batch, corrupt_batch)


def _reference(model, batch, corrupt_batch):
    h = model.entity_emb[batch[:, 0]]
    r = model.relation_emb[batch[:, 1]]
    t = model.entity_emb[batch[:, 2]]
    ch = model.entity_emb[corrupt_batch[:, 0]]
    cr = model.relation_emb[corrupt_batch[:, 1]]
    ct = model.entity_emb[corrupt_batch[:, 2]]
    return (jnp.sum((h + r - t) ** 2, axis=1),
            jnp.sum((ch + cr - ct) ** 2, axis=1))


if __name__ == "__main__":
    key = jax.random.PRNGKey(0)
    k_model, k_b, k_cb = jax.random.split(key, 3)

    entity_num = 16
    relation_num = 4
    emb_dimension = 32   # padded to 128 lanes inside the model
    batch_size = 12      # not a multiple of 8 -> exercises batch padding path

    model = TransE(entity_num, relation_num, emb_dimension, k_model)

    # Triples: (head_entity_id, relation_id, tail_entity_id)
    kh, kr, kt = jax.random.split(k_b, 3)
    batch = jnp.stack([
        jax.random.randint(kh, (batch_size,), 0, entity_num),
        jax.random.randint(kr, (batch_size,), 0, relation_num),
        jax.random.randint(kt, (batch_size,), 0, entity_num),
    ], axis=1).astype(jnp.int32)

    ckh, ckr, ckt = jax.random.split(k_cb, 3)
    corrupt_batch = jnp.stack([
        jax.random.randint(ckh, (batch_size,), 0, entity_num),
        jax.random.randint(ckr, (batch_size,), 0, relation_num),
        jax.random.randint(ckt, (batch_size,), 0, entity_num),
    ], axis=1).astype(jnp.int32)

    ref_correct, ref_corrupt = _reference(model, batch, corrupt_batch)

    # Exercise both paths (VMEM-resident fast path and HBM DMA fallback), each
    # with single-tile and multi-tile (padded last tile) grids.
    configs = [
        dict(),                                   # fast path, single tile (default)
        dict(max_tile=8),                         # fast path, 2 tiles + padding
        dict(force_hbm_path=True),                # HBM DMA-gather fallback
        dict(force_hbm_path=True, max_tile=8),    # fallback, 2 tiles + padding
    ]
    for cfg in configs:
        correct, corrupt = transe_scores(
            model.entity_emb_padded, model.relation_emb_padded,
            batch, corrupt_batch, **cfg)
        jax.block_until_ready((correct, corrupt))
        assert correct.shape == (batch_size,) and corrupt.shape == (batch_size,)
        assert jnp.allclose(correct, ref_correct, atol=1e-5, rtol=1e-5), cfg
        assert jnp.allclose(corrupt, ref_corrupt, atol=1e-5, rtol=1e-5), cfg

    # Default forward() (fast path) once more, as the module would be used.
    correct, corrupt = model.forward(batch, corrupt_batch)
    jax.block_until_ready((correct, corrupt))
    assert jnp.allclose(correct, ref_correct, atol=1e-5, rtol=1e-5)
    assert jnp.allclose(corrupt, ref_corrupt, atol=1e-5, rtol=1e-5)

    print("KERNEL_OK")
</pallas_src>

<mosaic_0001>
module attributes {stable_mosaic.version = 11 : i64} {
  func.func @_transe_vmem_kernel(%arg0: i32, %arg1: memref<16xi32, #tpu.memory_space<smem>>, %arg2: memref<16xi32, #tpu.memory_space<smem>>, %arg3: memref<16xi32, #tpu.memory_space<smem>>, %arg4: memref<16xi32, #tpu.memory_space<smem>>, %arg5: memref<16xi32, #tpu.memory_space<smem>>, %arg6: memref<16xi32, #tpu.memory_space<smem>>, %arg7: memref<16x128xf32, #tpu.memory_space<vmem>>, %arg8: memref<4x128xf32, #tpu.memory_space<vmem>>, %arg9: memref<16x2xf32, #tpu.memory_space<vmem>>, %arg10: memref<16x128xf32, #tpu.memory_space<vmem>>, %arg11: memref<16x128xf32, #tpu.memory_space<vmem>>) attributes {dimension_semantics = [#tpu.dimension_semantics<parallel>], iteration_bounds = array<i64: 1>, scalar_prefetch = 6 : i64, scratch_operands = 2 : i64, tpu.core_type = #tpu.core_type<tc>, window_params = [{pipeline_mode = #tpu.pipeline_mode<synchronous>, transform_indices = @transform_0, window_bounds = array<i64: 16, 128>}, {pipeline_mode = #tpu.pipeline_mode<synchronous>, transform_indices = @transform_1, window_bounds = array<i64: 4, 128>}, {transform_indices = @transform_2, window_bounds = array<i64: 16, 2>}]} {
    %c16_i32 = arith.constant 16 : i32
    %0 = arith.muli %arg0, %c16_i32 : i32
    %c0_i32 = arith.constant 0 : i32
    %c2_i32 = arith.constant 2 : i32
    %1 = arith.addi %c0_i32, %c2_i32 : i32
    %c1_i32 = arith.constant 1 : i32
    scf.for %arg12 = %c0_i32 to %1 step %c1_i32  : i32 {
      %c1_i32_7 = arith.constant 1 : i32
      %12 = arith.muli %arg12, %c1_i32_7 : i32
      %c0_i32_8 = arith.constant 0 : i32
      %13 = arith.addi %c0_i32_8, %12 : i32
      %c8_i32 = arith.constant 8 : i32
      %14 = arith.muli %13, %c8_i32 : i32
      %15 = tpu.assume_multiple %14, 8 : i32
      %c0_i32_9 = arith.constant 0 : i32
      %16 = arith.addi %15, %c0_i32_9 : i32
      %17 = arith.addi %0, %16 : i32
      %18 = arith.index_cast %17 : i32 to index
      %19 = memref.load %arg1[%18] : memref<16xi32, #tpu.memory_space<smem>>
      %20 = arith.index_cast %19 : i32 to index
      %c0_10 = arith.constant 0 : index
      %21 = vector.load %arg7[%20, %c0_10] : memref<16x128xf32, #tpu.memory_space<vmem>>, vector<1x128xf32>
      %22 = arith.index_cast %17 : i32 to index
      %23 = memref.load %arg2[%22] : memref<16xi32, #tpu.memory_space<smem>>
      %24 = arith.index_cast %23 : i32 to index
      %c0_11 = arith.constant 0 : index
      %25 = vector.load %arg8[%24, %c0_11] : memref<4x128xf32, #tpu.memory_space<vmem>>, vector<1x128xf32>
      %26 = arith.index_cast %17 : i32 to index
      %27 = memref.load %arg3[%26] : memref<16xi32, #tpu.memory_space<smem>>
      %28 = arith.index_cast %27 : i32 to index
      %c0_12 = arith.constant 0 : index
      %29 = vector.load %arg7[%28, %c0_12] : memref<16x128xf32, #tpu.memory_space<vmem>>, vector<1x128xf32>
      %30 = arith.index_cast %17 : i32 to index
      %31 = memref.load %arg4[%30] : memref<16xi32, #tpu.memory_space<smem>>
      %32 = arith.index_cast %31 : i32 to index
      %c0_13 = arith.constant 0 : index
      %33 = vector.load %arg7[%32, %c0_13] : memref<16x128xf32, #tpu.memory_space<vmem>>, vector<1x128xf32>
      %34 = arith.index_cast %17 : i32 to index
      %35 = memref.load %arg5[%34] : memref<16xi32, #tpu.memory_space<smem>>
      %36 = arith.index_cast %35 : i32 to index
      %c0_14 = arith.constant 0 : index
      %37 = vector.load %arg8[%36, %c0_14] : memref<4x128xf32, #tpu.memory_space<vmem>>, vector<1x128xf32>
      %38 = arith.index_cast %17 : i32 to index
      %39 = memref.load %arg6[%38] : memref<16xi32, #tpu.memory_space<smem>>
      %40 = arith.index_cast %39 : i32 to index
      %c0_15 = arith.constant 0 : index
      %41 = vector.load %arg7[%40, %c0_15] : memref<16x128xf32, #tpu.memory_space<vmem>>, vector<1x128xf32>
      %42 = arith.addf %21, %25 : vector<1x128xf32>
      %43 = arith.subf %42, %29 : vector<1x128xf32>
      %44 = arith.index_cast %16 : i32 to index
      %c0_16 = arith.constant 0 : index
      %45 = vector.load %arg10[%44, %c0_16] : memref<16x128xf32, #tpu.memory_space<vmem>>, vector<1x128xf32>
      tpu.vector_store %arg10[%44, %c0_16], %43 {strides = array<i32>} : memref<16x128xf32, #tpu.memory_space<vmem>>, vector<1x128xf32>,
      %46 = arith.addf %33, %37 : vector<1x128xf32>
      %47 = arith.subf %46, %41 : vector<1x128xf32>
      %48 = arith.index_cast %16 : i32 to index
      %c0_17 = arith.constant 0 : index
      %49 = vector.load %arg11[%48, %c0_17] : memref<16x128xf32, #tpu.memory_space<vmem>>, vector<1x128xf32>
      tpu.vector_store %arg11[%48, %c0_17], %47 {strides = array<i32>} : memref<16x128xf32, #tpu.memory_space<vmem>>, vector<1x128xf32>,
      %c1_i32_18 = arith.constant 1 : i32
      %50 = arith.addi %15, %c1_i32_18 : i32
      %51 = arith.addi %0, %50 : i32
      %52 = arith.index_cast %51 : i32 to index
      %53 = memref.load %arg1[%52] : memref<16xi32, #tpu.memory_space<smem>>
      %54 = arith.index_cast %53 : i32 to index
      %c0_19 = arith.constant 0 : index
      %55 = vector.load %arg7[%54, %c0_19] : memref<16x128xf32, #tpu.memory_space<vmem>>, vector<1x128xf32>
      %56 = arith.index_cast %51 : i32 to index
      %57 = memref.load %arg2[%56] : memref<16xi32, #tpu.memory_space<smem>>
      %58 = arith.index_cast %57 : i32 to index
      %c0_20 = arith.constant 0 : index
      %59 = vector.load %arg8[%58, %c0_20] : memref<4x128xf32, #tpu.memory_space<vmem>>, vector<1x128xf32>
      %60 = arith.index_cast %51 : i32 to index
      %61 = memref.load %arg3[%60] : memref<16xi32, #tpu.memory_space<smem>>
      %62 = arith.index_cast %61 : i32 to index
      %c0_21 = arith.constant 0 : index
      %63 = vector.load %arg7[%62, %c0_21] : memref<16x128xf32, #tpu.memory_space<vmem>>, vector<1x128xf32>
      %64 = arith.index_cast %51 : i32 to index
      %65 = memref.load %arg4[%64] : memref<16xi32, #tpu.memory_space<smem>>
      %66 = arith.index_cast %65 : i32 to index
      %c0_22 = arith.constant 0 : index
      %67 = vector.load %arg7[%66, %c0_22] : memref<16x128xf32, #tpu.memory_space<vmem>>, vector<1x128xf32>
      %68 = arith.index_cast %51 : i32 to index
      %69 = memref.load %arg5[%68] : memref<16xi32, #tpu.memory_space<smem>>
      %70 = arith.index_cast %69 : i32 to index
      %c0_23 = arith.constant 0 : index
      %71 = vector.load %arg8[%70, %c0_23] : memref<4x128xf32, #tpu.memory_space<vmem>>, vector<1x128xf32>
      %72 = arith.index_cast %51 : i32 to index
      %73 = memref.load %arg6[%72] : memref<16xi32, #tpu.memory_space<smem>>
      %74 = arith.index_cast %73 : i32 to index
      %c0_24 = arith.constant 0 : index
      %75 = vector.load %arg7[%74, %c0_24] : memref<16x128xf32, #tpu.memory_space<vmem>>, vector<1x128xf32>
      %76 = arith.addf %55, %59 : vector<1x128xf32>
      %77 = arith.subf %76, %63 : vector<1x128xf32>
      %78 = arith.index_cast %50 : i32 to index
      %c0_25 = arith.constant 0 : index
      %79 = vector.load %arg10[%78, %c0_25] : memref<16x128xf32, #tpu.memory_space<vmem>>, vector<1x128xf32>
      tpu.vector_store %arg10[%78, %c0_25], %77 {strides = array<i32>} : memref<16x128xf32, #tpu.memory_space<vmem>>, vector<1x128xf32>,
      %80 = arith.addf %67, %71 : vector<1x128xf32>
      %81 = arith.subf %80, %75 : vector<1x128xf32>
      %82 = arith.index_cast %50 : i32 to index
      %c0_26 = arith.constant 0 : index
      %83 = vector.load %arg11[%82, %c0_26] : memref<16x128xf32, #tpu.memory_space<vmem>>, vector<1x128xf32>
      tpu.vector_store %arg11[%82, %c0_26], %81 {strides = array<i32>} : memref<16x128xf32, #tpu.memory_space<vmem>>, vector<1x128xf32>,
      %c2_i32_27 = arith.constant 2 : i32
      %84 = arith.addi %15, %c2_i32_27 : i32
      %85 = arith.addi %0, %84 : i32
      %86 = arith.index_cast %85 : i32 to index
      %87 = memref.load %arg1[%86] : memref<16xi32, #tpu.memory_space<smem>>
      %88 = arith.index_cast %87 : i32 to index
      %c0_28 = arith.constant 0 : index
      %89 = vector.load %arg7[%88, %c0_28] : memref<16x128xf32, #tpu.memory_space<vmem>>, vector<1x128xf32>
      %90 = arith.index_cast %85 : i32 to index
      %91 = memref.load %arg2[%90] : memref<16xi32, #tpu.memory_space<smem>>
      %92 = arith.index_cast %91 : i32 to index
      %c0_29 = arith.constant 0 : index
      %93 = vector.load %arg8[%92, %c0_29] : memref<4x128xf32, #tpu.memory_space<vmem>>, vector<1x128xf32>
      %94 = arith.index_cast %85 : i32 to index
      %95 = memref.load %arg3[%94] : memref<16xi32, #tpu.memory_space<smem>>
      %96 = arith.index_cast %95 : i32 to index
      %c0_30 = arith.constant 0 : index
      %97 = vector.load %arg7[%96, %c0_30] : memref<16x128xf32, #tpu.memory_space<vmem>>, vector<1x128xf32>
      %98 = arith.index_cast %85 : i32 to index
      %99 = memref.load %arg4[%98] : memref<16xi32, #tpu.memory_space<smem>>
      %100 = arith.index_cast %99 : i32 to index
      %c0_31 = arith.constant 0 : index
      %101 = vector.load %arg7[%100, %c0_31] : memref<16x128xf32, #tpu.memory_space<vmem>>, vector<1x128xf32>
      %102 = arith.index_cast %85 : i32 to index
      %103 = memref.load %arg5[%102] : memref<16xi32, #tpu.memory_space<smem>>
      %104 = arith.index_cast %103 : i32 to index
      %c0_32 = arith.constant 0 : index
      %105 = vector.load %arg8[%104, %c0_32] : memref<4x128xf32, #tpu.memory_space<vmem>>, vector<1x128xf32>
      %106 = arith.index_cast %85 : i32 to index
      %107 = memref.load %arg6[%106] : memref<16xi32, #tpu.memory_space<smem>>
      %108 = arith.index_cast %107 : i32 to index
      %c0_33 = arith.constant 0 : index
      %109 = vector.load %arg7[%108, %c0_33] : memref<16x128xf32, #tpu.memory_space<vmem>>, vector<1x128xf32>
      %110 = arith.addf %89, %93 : vector<1x128xf32>
      %111 = arith.subf %110, %97 : vector<1x128xf32>
      %112 = arith.index_cast %84 : i32 to index
      %c0_34 = arith.constant 0 : index
      %113 = vector.load %arg10[%112, %c0_34] : memref<16x128xf32, #tpu.memory_space<vmem>>, vector<1x128xf32>
      tpu.vector_store %arg10[%112, %c0_34], %111 {strides = array<i32>} : memref<16x128xf32, #tpu.memory_space<vmem>>, vector<1x128xf32>,
      %114 = arith.addf %101, %105 : vector<1x128xf32>
      %115 = arith.subf %114, %109 : vector<1x128xf32>
      %116 = arith.index_cast %84 : i32 to index
      %c0_35 = arith.constant 0 : index
      %117 = vector.load %arg11[%116, %c0_35] : memref<16x128xf32, #tpu.memory_space<vmem>>, vector<1x128xf32>
      tpu.vector_store %arg11[%116, %c0_35], %115 {strides = array<i32>} : memref<16x128xf32, #tpu.memory_space<vmem>>, vector<1x128xf32>,
      %c3_i32 = arith.constant 3 : i32
      %118 = arith.addi %15, %c3_i32 : i32
      %119 = arith.addi %0, %118 : i32
      %120 = arith.index_cast %119 : i32 to index
      %121 = memref.load %arg1[%120] : memref<16xi32, #tpu.memory_space<smem>>
      %122 = arith.index_cast %121 : i32 to index
      %c0_36 = arith.constant 0 : index
      %123 = vector.load %arg7[%122, %c0_36] : memref<16x128xf32, #tpu.memory_space<vmem>>, vector<1x128xf32>
      %124 = arith.index_cast %119 : i32 to index
      %125 = memref.load %arg2[%124] : memref<16xi32, #tpu.memory_space<smem>>
      %126 = arith.index_cast %125 : i32 to index
      %c0_37 = arith.constant 0 : index
      %127 = vector.load %arg8[%126, %c0_37] : memref<4x128xf32, #tpu.memory_space<vmem>>, vector<1x128xf32>
      %128 = arith.index_cast %119 : i32 to index
      %129 = memref.load %arg3[%128] : memref<16xi32, #tpu.memory_space<smem>>
      %130 = arith.index_cast %129 : i32 to index
      %c0_38 = arith.constant 0 : index
      %131 = vector.load %arg7[%130, %c0_38] : memref<16x128xf32, #tpu.memory_space<vmem>>, vector<1x128xf32>
      %132 = arith.index_cast %119 : i32 to index
      %133 = memref.load %arg4[%132] : memref<16xi32, #tpu.memory_space<smem>>
      %134 = arith.index_cast %133 : i32 to index
      %c0_39 = arith.constant 0 : index
      %135 = vector.load %arg7[%134, %c0_39] : memref<16x128xf32, #tpu.memory_space<vmem>>, vector<1x128xf32>
      %136 = arith.index_cast %119 : i32 to index
      %137 = memref.load %arg5[%136] : memref<16xi32, #tpu.memory_space<smem>>
      %138 = arith.index_cast %137 : i32 to index
      %c0_40 = arith.constant 0 : index
      %139 = vector.load %arg8[%138, %c0_40] : memref<4x128xf32, #tpu.memory_space<vmem>>, vector<1x128xf32>
      %140 = arith.index_cast %119 : i32 to index
      %141 = memref.load %arg6[%140] : memref<16xi32, #tpu.memory_space<smem>>
      %142 = arith.index_cast %141 : i32 to index
      %c0_41 = arith.constant 0 : index
      %143 = vector.load %arg7[%142, %c0_41] : memref<16x128xf32, #tpu.memory_space<vmem>>, vector<1x128xf32>
      %144 = arith.addf %123, %127 : vector<1x128xf32>
      %145 = arith.subf %144, %131 : vector<1x128xf32>
      %146 = arith.index_cast %118 : i32 to index
      %c0_42 = arith.constant 0 : index
      %147 = vector.load %arg10[%146, %c0_42] : memref<16x128xf32, #tpu.memory_space<vmem>>, vector<1x128xf32>
      tpu.vector_store %arg10[%146, %c0_42], %145 {strides = array<i32>} : memref<16x128xf32, #tpu.memory_space<vmem>>, vector<1x128xf32>,
      %148 = arith.addf %135, %139 : vector<1x128xf32>
      %149 = arith.subf %148, %143 : vector<1x128xf32>
      %150 = arith.index_cast %118 : i32 to index
      %c0_43 = arith.constant 0 : index
      %151 = vector.load %arg11[%150, %c0_43] : memref<16x128xf32, #tpu.memory_space<vmem>>, vector<1x128xf32>
      tpu.vector_store %arg11[%150, %c0_43], %149 {strides = array<i32>} : memref<16x128xf32, #tpu.memory_space<vmem>>, vector<1x128xf32>,
      %c4_i32 = arith.constant 4 : i32
      %152 = arith.addi %15, %c4_i32 : i32
      %153 = arith.addi %0, %152 : i32
      %154 = arith.index_cast %153 : i32 to index
      %155 = memref.load %arg1[%154] : memref<16xi32, #tpu.memory_space<smem>>
      %156 = arith.index_cast %155 : i32 to index
      %c0_44 = arith.constant 0 : index
      %157 = vector.load %arg7[%156, %c0_44] : memref<16x128xf32, #tpu.memory_space<vmem>>, vector<1x128xf32>
      %158 = arith.index_cast %153 : i32 to index
      %159 = memref.load %arg2[%158] : memref<16xi32, #tpu.memory_space<smem>>
      %160 = arith.index_cast %159 : i32 to index
      %c0_45 = arith.constant 0 : index
      %161 = vector.load %arg8[%160, %c0_45] : memref<4x128xf32, #tpu.memory_space<vmem>>, vector<1x128xf32>
      %162 = arith.index_cast %153 : i32 to index
      %163 = memref.load %arg3[%162] : memref<16xi32, #tpu.memory_space<smem>>
      %164 = arith.index_cast %163 : i32 to index
      %c0_46 = arith.constant 0 : index
      %165 = vector.load %arg7[%164, %c0_46] : memref<16x128xf32, #tpu.memory_space<vmem>>, vector<1x128xf32>
      %166 = arith.index_cast %153 : i32 to index
      %167 = memref.load %arg4[%166] : memref<16xi32, #tpu.memory_space<smem>>
      %168 = arith.index_cast %167 : i32 to index
      %c0_47 = arith.constant 0 : index
      %169 = vector.load %arg7[%168, %c0_47] : memref<16x128xf32, #tpu.memory_space<vmem>>, vector<1x128xf32>
      %170 = arith.index_cast %153 : i32 to index
      %171 = memref.load %arg5[%170] : memref<16xi32, #tpu.memory_space<smem>>
      %172 = arith.index_cast %171 : i32 to index
      %c0_48 = arith.constant 0 : index
      %173 = vector.load %arg8[%172, %c0_48] : memref<4x128xf32, #tpu.memory_space<vmem>>, vector<1x128xf32>
      %174 = arith.index_cast %153 : i32 to index
      %175 = memref.load %arg6[%174] : memref<16xi32, #tpu.memory_space<smem>>
      %176 = arith.index_cast %175 : i32 to index
      %c0_49 = arith.constant 0 : index
      %177 = vector.load %arg7[%176, %c0_49] : memref<16x128xf32, #tpu.memory_space<vmem>>, vector<1x128xf32>
      %178 = arith.addf %157, %161 : vector<1x128xf32>
      %179 = arith.subf %178, %165 : vector<1x128xf32>
      %180 = arith.index_cast %152 : i32 to index
      %c0_50 = arith.constant 0 : index
      %181 = vector.load %arg10[%180, %c0_50] : memref<16x128xf32, #tpu.memory_space<vmem>>, vector<1x128xf32>
      tpu.vector_store %arg10[%180, %c0_50], %179 {strides = array<i32>} : memref<16x128xf32, #tpu.memory_space<vmem>>, vector<1x128xf32>,
      %182 = arith.addf %169, %173 : vector<1x128xf32>
      %183 = arith.subf %182, %177 : vector<1x128xf32>
      %184 = arith.index_cast %152 : i32 to index
      %c0_51 = arith.constant 0 : index
      %185 = vector.load %arg11[%184, %c0_51] : memref<16x128xf32, #tpu.memory_space<vmem>>, vector<1x128xf32>
      tpu.vector_store %arg11[%184, %c0_51], %183 {strides = array<i32>} : memref<16x128xf32, #tpu.memory_space<vmem>>, vector<1x128xf32>,
      %c5_i32 = arith.constant 5 : i32
      %186 = arith.addi %15, %c5_i32 : i32
      %187 = arith.addi %0, %186 : i32
      %188 = arith.index_cast %187 : i32 to index
      %189 = memref.load %arg1[%188] : memref<16xi32, #tpu.memory_space<smem>>
      %190 = arith.index_cast %189 : i32 to index
      %c0_52 = arith.constant 0 : index
      %191 = vector.load %arg7[%190, %c0_52] : memref<16x128xf32, #tpu.memory_space<vmem>>, vector<1x128xf32>
      %192 = arith.index_cast %187 : i32 to index
      %193 = memref.load %arg2[%192] : memref<16xi32, #tpu.memory_space<smem>>
      %194 = arith.index_cast %193 : i32 to index
      %c0_53 = arith.constant 0 : index
      %195 = vector.load %arg8[%194, %c0_53] : memref<4x128xf32, #tpu.memory_space<vmem>>, vector<1x128xf32>
      %196 = arith.index_cast %187 : i32 to index
      %197 = memref.load %arg3[%196] : memref<16xi32, #tpu.memory_space<smem>>
      %198 = arith.index_cast %197 : i32 to index
      %c0_54 = arith.constant 0 : index
      %199 = vector.load %arg7[%198, %c0_54] : memref<16x128xf32, #tpu.memory_space<vmem>>, vector<1x128xf32>
      %200 = arith.index_cast %187 : i32 to index
      %201 = memref.load %arg4[%200] : memref<16xi32, #tpu.memory_space<smem>>
      %202 = arith.index_cast %201 : i32 to index
      %c0_55 = arith.constant 0 : index
      %203 = vector.load %arg7[%202, %c0_55] : memref<16x128xf32, #tpu.memory_space<vmem>>, vector<1x128xf32>
      %204 = arith.index_cast %187 : i32 to index
      %205 = memref.load %arg5[%204] : memref<16xi32, #tpu.memory_space<smem>>
      %206 = arith.index_cast %205 : i32 to index
      %c0_56 = arith.constant 0 : index
      %207 = vector.load %arg8[%206, %c0_56] : memref<4x128xf32, #tpu.memory_space<vmem>>, vector<1x128xf32>
      %208 = arith.index_cast %187 : i32 to index
      %209 = memref.load %arg6[%208] : memref<16xi32, #tpu.memory_space<smem>>
      %210 = arith.index_cast %209 : i32 to index
      %c0_57 = arith.constant 0 : index
      %211 = vector.load %arg7[%210, %c0_57] : memref<16x128xf32, #tpu.memory_space<vmem>>, vector<1x128xf32>
      %212 = arith.addf %191, %195 : vector<1x128xf32>
      %213 = arith.subf %212, %199 : vector<1x128xf32>
      %214 = arith.index_cast %186 : i32 to index
      %c0_58 = arith.constant 0 : index
      %215 = vector.load %arg10[%214, %c0_58] : memref<16x128xf32, #tpu.memory_space<vmem>>, vector<1x128xf32>
      tpu.vector_store %arg10[%214, %c0_58], %213 {strides = array<i32>} : memref<16x128xf32, #tpu.memory_space<vmem>>, vector<1x128xf32>,
      %216 = arith.addf %203, %207 : vector<1x128xf32>
      %217 = arith.subf %216, %211 : vector<1x128xf32>
      %218 = arith.index_cast %186 : i32 to index
      %c0_59 = arith.constant 0 : index
      %219 = vector.load %arg11[%218, %c0_59] : memref<16x128xf32, #tpu.memory_space<vmem>>, vector<1x128xf32>
      tpu.vector_store %arg11[%218, %c0_59], %217 {strides = array<i32>} : memref<16x128xf32, #tpu.memory_space<vmem>>, vector<1x128xf32>,
      %c6_i32 = arith.constant 6 : i32
      %220 = arith.addi %15, %c6_i32 : i32
      %221 = arith.addi %0, %220 : i32
      %222 = arith.index_cast %221 : i32 to index
      %223 = memref.load %arg1[%222] : memref<16xi32, #tpu.memory_space<smem>>
      %224 = arith.index_cast %223 : i32 to index
      %c0_60 = arith.constant 0 : index
      %225 = vector.load %arg7[%224, %c0_60] : memref<16x128xf32, #tpu.memory_space<vmem>>, vector<1x128xf32>
      %226 = arith.index_cast %221 : i32 to index
      %227 = memref.load %arg2[%226] : memref<16xi32, #tpu.memory_space<smem>>
      %228 = arith.index_cast %227 : i32 to index
      %c0_61 = arith.constant 0 : index
      %229 = vector.load %arg8[%228, %c0_61] : memref<4x128xf32, #tpu.memory_space<vmem>>, vector<1x128xf32>
      %230 = arith.index_cast %221 : i32 to index
      %231 = memref.load %arg3[%230] : memref<16xi32, #tpu.memory_space<smem>>
      %232 = arith.index_cast %231 : i32 to index
      %c0_62 = arith.constant 0 : index
      %233 = vector.load %arg7[%232, %c0_62] : memref<16x128xf32, #tpu.memory_space<vmem>>, vector<1x128xf32>
      %234 = arith.index_cast %221 : i32 to index
      %235 = memref.load %arg4[%234] : memref<16xi32, #tpu.memory_space<smem>>
      %236 = arith.index_cast %235 : i32 to index
      %c0_63 = arith.constant 0 : index
      %237 = vector.load %arg7[%236, %c0_63] : memref<16x128xf32, #tpu.memory_space<vmem>>, vector<1x128xf32>
      %238 = arith.index_cast %221 : i32 to index
      %239 = memref.load %arg5[%238] : memref<16xi32, #tpu.memory_space<smem>>
      %240 = arith.index_cast %239 : i32 to index
      %c0_64 = arith.constant 0 : index
      %241 = vector.load %arg8[%240, %c0_64] : memref<4x128xf32, #tpu.memory_space<vmem>>, vector<1x128xf32>
      %242 = arith.index_cast %221 : i32 to index
      %243 = memref.load %arg6[%242] : memref<16xi32, #tpu.memory_space<smem>>
      %244 = arith.index_cast %243 : i32 to index
      %c0_65 = arith.constant 0 : index
      %245 = vector.load %arg7[%244, %c0_65] : memref<16x128xf32, #tpu.memory_space<vmem>>, vector<1x128xf32>
      %246 = arith.addf %225, %229 : vector<1x128xf32>
      %247 = arith.subf %246, %233 : vector<1x128xf32>
      %248 = arith.index_cast %220 : i32 to index
      %c0_66 = arith.constant 0 : index
      %249 = vector.load %arg10[%248, %c0_66] : memref<16x128xf32, #tpu.memory_space<vmem>>, vector<1x128xf32>
      tpu.vector_store %arg10[%248, %c0_66], %247 {strides = array<i32>} : memref<16x128xf32, #tpu.memory_space<vmem>>, vector<1x128xf32>,
      %250 = arith.addf %237, %241 : vector<1x128xf32>
      %251 = arith.subf %250, %245 : vector<1x128xf32>
      %252 = arith.index_cast %220 : i32 to index
      %c0_67 = arith.constant 0 : index
      %253 = vector.load %arg11[%252, %c0_67] : memref<16x128xf32, #tpu.memory_space<vmem>>, vector<1x128xf32>
      tpu.vector_store %arg11[%252, %c0_67], %251 {strides = array<i32>} : memref<16x128xf32, #tpu.memory_space<vmem>>, vector<1x128xf32>,
      %c7_i32 = arith.constant 7 : i32
      %254 = arith.addi %15, %c7_i32 : i32
      %255 = arith.addi %0, %254 : i32
      %256 = arith.index_cast %255 : i32 to index
      %257 = memref.load %arg1[%256] : memref<16xi32, #tpu.memory_space<smem>>
      %258 = arith.index_cast %257 : i32 to index
      %c0_68 = arith.constant 0 : index
      %259 = vector.load %arg7[%258, %c0_68] : memref<16x128xf32, #tpu.memory_space<vmem>>, vector<1x128xf32>
      %260 = arith.index_cast %255 : i32 to index
      %261 = memref.load %arg2[%260] : memref<16xi32, #tpu.memory_space<smem>>
      %262 = arith.index_cast %261 : i32 to index
      %c0_69 = arith.constant 0 : index
      %263 = vector.load %arg8[%262, %c0_69] : memref<4x128xf32, #tpu.memory_space<vmem>>, vector<1x128xf32>
      %264 = arith.index_cast %255 : i32 to index
      %265 = memref.load %arg3[%264] : memref<16xi32, #tpu.memory_space<smem>>
      %266 = arith.index_cast %265 : i32 to index
      %c0_70 = arith.constant 0 : index
      %267 = vector.load %arg7[%266, %c0_70] : memref<16x128xf32, #tpu.memory_space<vmem>>, vector<1x128xf32>
      %268 = arith.index_cast %255 : i32 to index
      %269 = memref.load %arg4[%268] : memref<16xi32, #tpu.memory_space<smem>>
      %270 = arith.index_cast %269 : i32 to index
      %c0_71 = arith.constant 0 : index
      %271 = vector.load %arg7[%270, %c0_71] : memref<16x128xf32, #tpu.memory_space<vmem>>, vector<1x128xf32>
      %272 = arith.index_cast %255 : i32 to index
      %273 = memref.load %arg5[%272] : memref<16xi32, #tpu.memory_space<smem>>
      %274 = arith.index_cast %273 : i32 to index
      %c0_72 = arith.constant 0 : index
      %275 = vector.load %arg8[%274, %c0_72] : memref<4x128xf32, #tpu.memory_space<vmem>>, vector<1x128xf32>
      %276 = arith.index_cast %255 : i32 to index
      %277 = memref.load %arg6[%276] : memref<16xi32, #tpu.memory_space<smem>>
      %278 = arith.index_cast %277 : i32 to index
      %c0_73 = arith.constant 0 : index
      %279 = vector.load %arg7[%278, %c0_73] : memref<16x128xf32, #tpu.memory_space<vmem>>, vector<1x128xf32>
      %280 = arith.addf %259, %263 : vector<1x128xf32>
      %281 = arith.subf %280, %267 : vector<1x128xf32>
      %282 = arith.index_cast %254 : i32 to index
      %c0_74 = arith.constant 0 : index
      %283 = vector.load %arg10[%282, %c0_74] : memref<16x128xf32, #tpu.memory_space<vmem>>, vector<1x128xf32>
      tpu.vector_store %arg10[%282, %c0_74], %281 {strides = array<i32>} : memref<16x128xf32, #tpu.memory_space<vmem>>, vector<1x128xf32>,
      %284 = arith.addf %271, %275 : vector<1x128xf32>
      %285 = arith.subf %284, %279 : vector<1x128xf32>
      %286 = arith.index_cast %254 : i32 to index
      %c0_75 = arith.constant 0 : index
      %287 = vector.load %arg11[%286, %c0_75] : memref<16x128xf32, #tpu.memory_space<vmem>>, vector<1x128xf32>
      tpu.vector_store %arg11[%286, %c0_75], %285 {strides = array<i32>} : memref<16x128xf32, #tpu.memory_space<vmem>>, vector<1x128xf32>,
    }
    %c2_i32_0 = arith.constant 2 : i32
    %c0 = arith.constant 0 : index
    %c0_1 = arith.constant 0 : index
    %2 = vector.load %arg10[%c0, %c0_1] : memref<16x128xf32, #tpu.memory_space<vmem>>, vector<16x128xf32>
    %c0_2 = arith.constant 0 : index
    %c0_3 = arith.constant 0 : index
    %3 = vector.load %arg11[%c0_2, %c0_3] : memref<16x128xf32, #tpu.memory_space<vmem>>, vector<16x128xf32>
    %4 = arith.mulf %2, %2 : vector<16x128xf32>
    %cst = arith.constant dense<0.000000e+00> : vector<16xf32>
    %5 = vector.multi_reduction <add>, %4, %cst [1] : vector<16x128xf32> to vector<16xf32>
    %6 = vector.shape_cast %5 : vector<16xf32> to vector<16x1xf32>
    %7 = arith.mulf %3, %3 : vector<16x128xf32>
    %cst_4 = arith.constant dense<0.000000e+00> : vector<16xf32>
    %8 = vector.multi_reduction <add>, %7, %cst_4 [1] : vector<16x128xf32> to vector<16xf32>
    %9 = vector.shape_cast %8 : vector<16xf32> to vector<16x1xf32>
    %10 = tpu.concatenate %6, %9 in 1 : vector<16x1xf32>, vector<16x1xf32> -> vector<16x2xf32>
    %c0_5 = arith.constant 0 : index
    %c0_6 = arith.constant 0 : index
    %11 = vector.load %arg9[%c0_5, %c0_6] : memref<16x2xf32, #tpu.memory_space<vmem>>, vector<16x2xf32>
    tpu.vector_store %arg9[%c0_5, %c0_6], %10 {strides = array<i32>} : memref<16x2xf32, #tpu.memory_space<vmem>>, vector<16x2xf32>,
    return
  }
  func.func @transform_0(%arg0: i32, %arg1: memref<16xi32, #tpu.memory_space<smem>>, %arg2: memref<16xi32, #tpu.memory_space<smem>>, %arg3: memref<16xi32, #tpu.memory_space<smem>>, %arg4: memref<16xi32, #tpu.memory_space<smem>>, %arg5: memref<16xi32, #tpu.memory_space<smem>>, %arg6: memref<16xi32, #tpu.memory_space<smem>>) -> (i32, i32) {
    %c0_i32 = arith.constant 0 : i32
    %c0_i32_0 = arith.constant 0 : i32
    %c0_i32_1 = arith.constant 0 : i32
    return %c0_i32, %c0_i32_0 : i32, i32
  }
  func.func @transform_1(%arg0: i32, %arg1: memref<16xi32, #tpu.memory_space<smem>>, %arg2: memref<16xi32, #tpu.memory_space<smem>>, %arg3: memref<16xi32, #tpu.memory_space<smem>>, %arg4: memref<16xi32, #tpu.memory_space<smem>>, %arg5: memref<16xi32, #tpu.memory_space<smem>>, %arg6: memref<16xi32, #tpu.memory_space<smem>>) -> (i32, i32) {
    %c0_i32 = arith.constant 0 : i32
    %c0_i32_0 = arith.constant 0 : i32
    %c0_i32_1 = arith.constant 0 : i32
    return %c0_i32, %c0_i32_0 : i32, i32
  }
  func.func @transform_2(%arg0: i32, %arg1: memref<16xi32, #tpu.memory_space<smem>>, %arg2: memref<16xi32, #tpu.memory_space<smem>>, %arg3: memref<16xi32, #tpu.memory_space<smem>>, %arg4: memref<16xi32, #tpu.memory_space<smem>>, %arg5: memref<16xi32, #tpu.memory_space<smem>>, %arg6: memref<16xi32, #tpu.memory_space<smem>>) -> (i32, i32) {
    %c0_i32 = arith.constant 0 : i32
    %c0_i32_0 = arith.constant 0 : i32
    return %arg0, %c0_i32 : i32, i32
  }
}

</mosaic_0001>

<llo_original>
// kernel: tpu_custom_call.1
$region0: #{tpu_custom_call.1}
  #allocation0 [shape = 'u32[]', space=smem, size = 0x4, offset = 0x4, fixed_abs, tag = 'smem constant byte address 0x4 - core index']
  #allocation1 [shape = 'u32[144,128]{1,0:T(1,128)}', space=vmem, size = 0x12000, scoped, tag = 'internal scratch']
  #allocation2 [shape = 'f32[16,128]{1,0:T(8,128)}', space=vmem, size = 0x2000, scoped, tag = 'scratch operand']
  #allocation3 [shape = 'f32[16,128]{1,0:T(8,128)}', space=vmem, size = 0x2000, scoped, tag = 'scratch operand']
  #allocation4 [shape = 's32[1]{0}', space=sflag, size = 0x4, scoped, tag = 'scoped memory for tpu_custom_call.1']
  #allocation5 [shape = 'u8[512]{0}', space=smem, size = 0x200, scoped, tag = 'prefetched SMEM operand 0']
  #allocation6 [shape = 'u8[512]{0}', space=smem, size = 0x200, scoped, tag = 'prefetched SMEM operand 1']
  #allocation7 [shape = 'u8[512]{0}', space=smem, size = 0x200, scoped, tag = 'prefetched SMEM operand 2']
  #allocation8 [shape = 'u8[512]{0}', space=smem, size = 0x200, scoped, tag = 'prefetched SMEM operand 3']
  #allocation9 [shape = 'u8[512]{0}', space=smem, size = 0x200, scoped, tag = 'prefetched SMEM operand 4']
  #allocation10 [shape = 'u8[512]{0}', space=smem, size = 0x200, scoped, tag = 'prefetched SMEM operand 5']
  %s0 = inlined_call_operand.hbm [shape: s32[16], index: 0, kind: input, shape index: {}]
  %s1 = inlined_call_operand.vmem [shape: s32[16], index: 1, kind: input, shape index: {}]
  %s2 = inlined_call_operand.vmem [shape: s32[16], index: 2, kind: input, shape index: {}]
  %s3 = inlined_call_operand.vmem [shape: s32[16], index: 3, kind: input, shape index: {}]
  %s4 = inlined_call_operand.hbm [shape: s32[16], index: 4, kind: input, shape index: {}]
  %s5 = inlined_call_operand.vmem [shape: s32[16], index: 5, kind: input, shape index: {}]
  %s6 = inlined_call_operand.hbm [shape: f32[16,128], index: 6, kind: input, shape index: {}]
  %s7 = inlined_call_operand.vmem [shape: f32[4,128], index: 7, kind: input, shape index: {}]
  %s8 = inlined_call_operand.vmem [shape: f32[16,2], index: 8, kind: output, shape index: {}]
  %s9 = sld [smem:[#allocation0]]
  $region29: #{tpu_custom_call.1} parent=0
    _
  %s11 = ssub.s32 1, %s9
  %s12 = scalar_select 0, %s11, %s9
  %14 = dma.hbm_to_smem %s0, 16, [#allocation5], [#allocation4]
  %s15 = sshll.u32 %s1, 4
  %s16 = int_to_ptr.vmem [resolvable:$true] %s15
  %18 = dma.vmem_to_smem %s16, 16, [#allocation6], [#allocation4]
  %s19 = sshll.u32 %s2, 4
  %s20 = int_to_ptr.vmem [resolvable:$true] %s19
  %22 = dma.vmem_to_smem %s20, 16, [#allocation7], [#allocation4]
  %s23 = sshll.u32 %s3, 4
  %s24 = int_to_ptr.vmem [resolvable:$true] %s23
  %26 = dma.vmem_to_smem %s24, 16, [#allocation8], [#allocation4]
  %28 = dma.hbm_to_smem %s4, 16, [#allocation9], [#allocation4]
  %s29 = sshll.u32 %s5, 4
  %s30 = int_to_ptr.vmem [resolvable:$true] %s29
  %32 = dma.vmem_to_smem %s30, 16, [#allocation10], [#allocation4]
  %33 = dma.done [#allocation4], 96
  %34 = sfence
  $region1: #{tpu_custom_call.1} parent=0
    #allocation11 [shape = 'u8[8192]{0}', space=vmem, size = 0x2000, scoped, tag = 'input window, operand 6, single buffered']
    #allocation12 [shape = 's32[1]{0}', space=sflag, size = 0x4, scoped, tag = 'scoped memory for tpu_custom_call.1']
    %35 = vsyncpa [#allocation12], 0
    // Predicated region
    $region2: #{tpu_custom_call.1} parent=1 // pred_check
      _
    $region3: #{tpu_custom_call.1} parent=1 // pred_check_branch
      %37 = sbr.rel (0) target = $region5
    $region4: #{tpu_custom_call.1} parent=1 // pred_region
      %s39 = ssub.s32 256, 256
      %40 = vsyncadd [#allocation12], %s39
      %s41 = sshll.u32 [#allocation11], 4
      %s42 = int_to_ptr.vmem [resolvable:$true] %s41
      %47 = dma.hbm_to_vmem [thread:$0]  %s6, 256, %s42, [#allocation12], 128, 128, 8
    $region5: #{tpu_custom_call.1} parent=1 // pred_fallthru
      _
    // Predicated region
    $region6: #{tpu_custom_call.1} parent=1 // pred_check
      _
    $region7: #{tpu_custom_call.1} parent=1 // pred_check_branch
      %49 = sbr.rel (0) target = $region9
    $region8: #{tpu_custom_call.1} parent=1 // pred_region
      _
    $region9: #{tpu_custom_call.1} parent=1 // pred_fallthru
      _
    // Predicated region
    $region10: #{tpu_custom_call.1} parent=1 // pred_check
      _
    $region11: #{tpu_custom_call.1} parent=1 // pred_check_branch
      %51 = sbr.rel (0) target = $region13
    $region12: #{tpu_custom_call.1} parent=1 // pred_region
      %52 = dma.done [#allocation12], 256
    $region13: #{tpu_custom_call.1} parent=1 // pred_fallthru
      _
    %s53 = smul.u32 0, 16
    loop: start=0, step=1, limit=2
    $region14: #{tpu_custom_call.1} parent=1 // loop_pre_header
      _
    $region15: #{tpu_custom_call.1} parent=1 // loop_header
      %s55 = sphi 0, %s59
      %p56 = scmp.ge.s32.totalorder %s55, 2
    $region16: #{tpu_custom_call.1} parent=1 // loop_header_branch
      %58 = sbr.rel (%p56) target = $region20
    $region17: #{tpu_custom_call.1} parent=1 // loop_body
      %s60 = smul.u32 %s55, 8
      %s61 = sadd.s32 %s53, %s60
      %s62 = sld [smem:[#allocation5 + %s61]]
      %s63 = scalar_lea.vmem [#allocation11], %s62
      %v64 = vld [vmem:[%s63] sm:$0x1]
      %s65 = sld [smem:[#allocation6 + %s61]]
      %s66 = scalar_lea.vmem %s7, %s65
      %v67 = vld [vmem:[%s66] sm:$0x1]
      %s68 = sld [smem:[#allocation7 + %s61]]
      %s69 = scalar_lea.vmem [#allocation11], %s68
      %v70 = vld [vmem:[%s69] sm:$0x1]
      %s71 = sld [smem:[#allocation8 + %s61]]
      %s72 = scalar_lea.vmem [#allocation11], %s71
      %v73 = vld [vmem:[%s72] sm:$0x1]
      %s74 = sld [smem:[#allocation9 + %s61]]
      %s75 = scalar_lea.vmem %s7, %s74
      %v76 = vld [vmem:[%s75] sm:$0x1]
      %s77 = sld [smem:[#allocation10 + %s61]]
      %s78 = scalar_lea.vmem [#allocation11], %s77
      %v79 = vld [vmem:[%s78] sm:$0x1]
      %v80 = vadd.f32 %v64, %v67
      %v81 = vsub.f32 %v80, %v70
      %s82 = scalar_lea.vmem [#allocation2], %s60
      %83 = vst [vmem:[%s82] sm:$0x1] %v81
      %v84 = vadd.f32 %v73, %v76
      %v85 = vsub.f32 %v84, %v79
      %s86 = scalar_lea.vmem [#allocation3], %s60
      %87 = vst [vmem:[%s86] sm:$0x1] %v85
      %s88 = sadd.s32 %s60, 1
      %s89 = sadd.s32 %s53, %s88
      %s90 = sld [smem:[#allocation5 + %s89]]
      %s91 = scalar_lea.vmem [#allocation11], %s90
      %v92 = vld [vmem:[%s91] sm:$0x1]
      %s93 = sld [smem:[#allocation6 + %s89]]
      %s94 = scalar_lea.vmem %s7, %s93
      %v95 = vld [vmem:[%s94] sm:$0x1]
      %s96 = sld [smem:[#allocation7 + %s89]]
      %s97 = scalar_lea.vmem [#allocation11], %s96
      %v98 = vld [vmem:[%s97] sm:$0x1]
      %s99 = sld [smem:[#allocation8 + %s89]]
      %s100 = scalar_lea.vmem [#allocation11], %s99
      %v101 = vld [vmem:[%s100] sm:$0x1]
      %s102 = sld [smem:[#allocation9 + %s89]]
      %s103 = scalar_lea.vmem %s7, %s102
      %v104 = vld [vmem:[%s103] sm:$0x1]
      %s105 = sld [smem:[#allocation10 + %s89]]
      %s106 = scalar_lea.vmem [#allocation11], %s105
      %v107 = vld [vmem:[%s106] sm:$0x1]
      %v108 = vadd.f32 %v92, %v95
      %v109 = vsub.f32 %v108, %v98
      %s110 = scalar_lea.vmem [#allocation2], %s88
      %111 = vst [vmem:[%s110] sm:$0x1] %v109
      %v112 = vadd.f32 %v101, %v104
      %v113 = vsub.f32 %v112, %v107
      %s114 = scalar_lea.vmem [#allocation3], %s88
      %115 = vst [vmem:[%s114] sm:$0x1] %v113
      %s116 = sadd.s32 %s60, 2
      %s117 = sadd.s32 %s53, %s116
      %s118 = sld [smem:[#allocation5 + %s117]]
      %s119 = scalar_lea.vmem [#allocation11], %s118
      %v120 = vld [vmem:[%s119] sm:$0x1]
      %s121 = sld [smem:[#allocation6 + %s117]]
      %s122 = scalar_lea.vmem %s7, %s121
      %v123 = vld [vmem:[%s122] sm:$0x1]
      %s124 = sld [smem:[#allocation7 + %s117]]
      %s125 = scalar_lea.vmem [#allocation11], %s124
      %v126 = vld [vmem:[%s125] sm:$0x1]
      %s127 = sld [smem:[#allocation8 + %s117]]
      %s128 = scalar_lea.vmem [#allocation11], %s127
      %v129 = vld [vmem:[%s128] sm:$0x1]
      %s130 = sld [smem:[#allocation9 + %s117]]
      %s131 = scalar_lea.vmem %s7, %s130
      %v132 = vld [vmem:[%s131] sm:$0x1]
      %s133 = sld [smem:[#allocation10 + %s117]]
      %s134 = scalar_lea.vmem [#allocation11], %s133
      %v135 = vld [vmem:[%s134] sm:$0x1]
      %v136 = vadd.f32 %v120, %v123
      %v137 = vsub.f32 %v136, %v126
      %s138 = scalar_lea.vmem [#allocation2], %s116
      %139 = vst [vmem:[%s138] sm:$0x1] %v137
      %v140 = vadd.f32 %v129, %v132
      %v141 = vsub.f32 %v140, %v135
      %s142 = scalar_lea.vmem [#allocation3], %s116
      %143 = vst [vmem:[%s142] sm:$0x1] %v141
      %s144 = sadd.s32 %s60, 3
      %s145 = sadd.s32 %s53, %s144
      %s146 = sld [smem:[#allocation5 + %s145]]
      %s147 = scalar_lea.vmem [#allocation11], %s146
      %v148 = vld [vmem:[%s147] sm:$0x1]
      %s149 = sld [smem:[#allocation6 + %s145]]
      %s150 = scalar_lea.vmem %s7, %s149
      %v151 = vld [vmem:[%s150] sm:$0x1]
      %s152 = sld [smem:[#allocation7 + %s145]]
      %s153 = scalar_lea.vmem [#allocation11], %s152
      %v154 = vld [vmem:[%s153] sm:$0x1]
      %s155 = sld [smem:[#allocation8 + %s145]]
      %s156 = scalar_lea.vmem [#allocation11], %s155
      %v157 = vld [vmem:[%s156] sm:$0x1]
      %s158 = sld [smem:[#allocation9 + %s145]]
      %s159 = scalar_lea.vmem %s7, %s158
      %v160 = vld [vmem:[%s159] sm:$0x1]
      %s161 = sld [smem:[#allocation10 + %s145]]
      %s162 = scalar_lea.vmem [#allocation11], %s161
      %v163 = vld [vmem:[%s162] sm:$0x1]
      %v164 = vadd.f32 %v148, %v151
      %v165 = vsub.f32 %v164, %v154
      %s166 = scalar_lea.vmem [#allocation2], %s144
      %167 = vst [vmem:[%s166] sm:$0x1] %v165
      %v168 = vadd.f32 %v157, %v160
      %v169 = vsub.f32 %v168, %v163
      %s170 = scalar_lea.vmem [#allocation3], %s144
      %171 = vst [vmem:[%s170] sm:$0x1] %v169
      %s172 = sadd.s32 %s60, 4
      %s173 = sadd.s32 %s53, %s172
      %s174 = sld [smem:[#allocation5 + %s173]]
      %s175 = scalar_lea.vmem [#allocation11], %s174
      %v176 = vld [vmem:[%s175] sm:$0x1]
      %s177 = sld [smem:[#allocation6 + %s173]]
      %s178 = scalar_lea.vmem %s7, %s177
      %v179 = vld [vmem:[%s178] sm:$0x1]
      %s180 = sld [smem:[#allocation7 + %s173]]
      %s181 = scalar_lea.vmem [#allocation11], %s180
      %v182 = vld [vmem:[%s181] sm:$0x1]
      %s183 = sld [smem:[#allocation8 + %s173]]
      %s184 = scalar_lea.vmem [#allocation11], %s183
      %v185 = vld [vmem:[%s184] sm:$0x1]
      %s186 = sld [smem:[#allocation9 + %s173]]
      %s187 = scalar_lea.vmem %s7, %s186
      %v188 = vld [vmem:[%s187] sm:$0x1]
      %s189 = sld [smem:[#allocation10 + %s173]]
      %s190 = scalar_lea.vmem [#allocation11], %s189
      %v191 = vld [vmem:[%s190] sm:$0x1]
      %v192 = vadd.f32 %v176, %v179
      %v193 = vsub.f32 %v192, %v182
      %s194 = scalar_lea.vmem [#allocation2], %s172
      %195 = vst [vmem:[%s194] sm:$0x1] %v193
      %v196 = vadd.f32 %v185, %v188
      %v197 = vsub.f32 %v196, %v191
      %s198 = scalar_lea.vmem [#allocation3], %s172
      %199 = vst [vmem:[%s198] sm:$0x1] %v197
      %s200 = sadd.s32 %s60, 5
      %s201 = sadd.s32 %s53, %s200
      %s202 = sld [smem:[#allocation5 + %s201]]
      %s203 = scalar_lea.vmem [#allocation11], %s202
      %v204 = vld [vmem:[%s203] sm:$0x1]
      %s205 = sld [smem:[#allocation6 + %s201]]
      %s206 = scalar_lea.vmem %s7, %s205
      %v207 = vld [vmem:[%s206] sm:$0x1]
      %s208 = sld [smem:[#allocation7 + %s201]]
      %s209 = scalar_lea.vmem [#allocation11], %s208
      %v210 = vld [vmem:[%s209] sm:$0x1]
      %s211 = sld [smem:[#allocation8 + %s201]]
      %s212 = scalar_lea.vmem [#allocation11], %s211
      %v213 = vld [vmem:[%s212] sm:$0x1]
      %s214 = sld [smem:[#allocation9 + %s201]]
      %s215 = scalar_lea.vmem %s7, %s214
      %v216 = vld [vmem:[%s215] sm:$0x1]
      %s217 = sld [smem:[#allocation10 + %s201]]
      %s218 = scalar_lea.vmem [#allocation11], %s217
      %v219 = vld [vmem:[%s218] sm:$0x1]
      %v220 = vadd.f32 %v204, %v207
      %v221 = vsub.f32 %v220, %v210
      %s222 = scalar_lea.vmem [#allocation2], %s200
      %223 = vst [vmem:[%s222] sm:$0x1] %v221
      %v224 = vadd.f32 %v213, %v216
      %v225 = vsub.f32 %v224, %v219
      %s226 = scalar_lea.vmem [#allocation3], %s200
      %227 = vst [vmem:[%s226] sm:$0x1] %v225
      %s228 = sadd.s32 %s60, 6
      %s229 = sadd.s32 %s53, %s228
      %s230 = sld [smem:[#allocation5 + %s229]]
      %s231 = scalar_lea.vmem [#allocation11], %s230
      %v232 = vld [vmem:[%s231] sm:$0x1]
      %s233 = sld [smem:[#allocation6 + %s229]]
      %s234 = scalar_lea.vmem %s7, %s233
      %v235 = vld [vmem:[%s234] sm:$0x1]
      %s236 = sld [smem:[#allocation7 + %s229]]
      %s237 = scalar_lea.vmem [#allocation11], %s236
      %v238 = vld [vmem:[%s237] sm:$0x1]
      %s239 = sld [smem:[#allocation8 + %s229]]
      %s240 = scalar_lea.vmem [#allocation11], %s239
      %v241 = vld [vmem:[%s240] sm:$0x1]
      %s242 = sld [smem:[#allocation9 + %s229]]
      %s243 = scalar_lea.vmem %s7, %s242
      %v244 = vld [vmem:[%s243] sm:$0x1]
      %s245 = sld [smem:[#allocation10 + %s229]]
      %s246 = scalar_lea.vmem [#allocation11], %s245
      %v247 = vld [vmem:[%s246] sm:$0x1]
      %v248 = vadd.f32 %v232, %v235
      %v249 = vsub.f32 %v248, %v238
      %s250 = scalar_lea.vmem [#allocation2], %s228
      %251 = vst [vmem:[%s250] sm:$0x1] %v249
      %v252 = vadd.f32 %v241, %v244
      %v253 = vsub.f32 %v252, %v247
      %s254 = scalar_lea.vmem [#allocation3], %s228
      %255 = vst [vmem:[%s254] sm:$0x1] %v253
      %s256 = sadd.s32 %s60, 7
      %s257 = sadd.s32 %s53, %s256
      %s258 = sld [smem:[#allocation5 + %s257]]
      %s259 = scalar_lea.vmem [#allocation11], %s258
      %v260 = vld [vmem:[%s259] sm:$0x1]
      %s261 = sld [smem:[#allocation6 + %s257]]
      %s262 = scalar_lea.vmem %s7, %s261
      %v263 = vld [vmem:[%s262] sm:$0x1]
      %s264 = sld [smem:[#allocation7 + %s257]]
      %s265 = scalar_lea.vmem [#allocation11], %s264
      %v266 = vld [vmem:[%s265] sm:$0x1]
      %s267 = sld [smem:[#allocation8 + %s257]]
      %s268 = scalar_lea.vmem [#allocation11], %s267
      %v269 = vld [vmem:[%s268] sm:$0x1]
      %s270 = sld [smem:[#allocation9 + %s257]]
      %s271 = scalar_lea.vmem %s7, %s270
      %v272 = vld [vmem:[%s271] sm:$0x1]
      %s273 = sld [smem:[#allocation10 + %s257]]
      %s274 = scalar_lea.vmem [#allocation11], %s273
      %v275 = vld [vmem:[%s274] sm:$0x1]
      %v276 = vadd.f32 %v260, %v263
      %v277 = vsub.f32 %v276, %v266
      %s278 = scalar_lea.vmem [#allocation2], %s256
      %279 = vst [vmem:[%s278] sm:$0x1] %v277
      %v280 = vadd.f32 %v269, %v272
      %v281 = vsub.f32 %v280, %v275
      %s282 = scalar_lea.vmem [#allocation3], %s256
      %283 = vst [vmem:[%s282] sm:$0x1] %v281
    $region18: #{tpu_custom_call.1} parent=1 // loop_footer
      %s59 = sadd.s32 1, %s55
    $region19: #{tpu_custom_call.1} parent=1 // loop_footer_branch
      %54 = sbr.rel target = $region15
    $region20: #{tpu_custom_call.1} parent=1 // loop_exit
      _
    %v284 = vld [vmem:[#allocation2] sm:$0xff]
    %v285 = vld [vmem:[#allocation2 + $0x8] sm:$0xff]
    %v286 = vld [vmem:[#allocation3] sm:$0xff]
    %v287 = vld [vmem:[#allocation3 + $0x8] sm:$0xff]
    %v288 = vmul.f32 %v284, %v284
    %v289 = vmul.f32 %v285, %v285
    %290 = vadd.xlane.f32.xlu0 %v288
    %v291 = vpop.xlane.xlu0 %290
    %292 = vadd.xlane.f32.xlu0 %v289
    %v293 = vpop.xlane.xlu0 %292
    %v294 = vmul.f32 %v286, %v286
    %v295 = vmul.f32 %v287, %v287
    %296 = vadd.xlane.f32.xlu0 %v294
    %v297 = vpop.xlane.xlu0 %296
    %298 = vadd.xlane.f32.xlu0 %v295
    %v299 = vpop.xlane.xlu0 %298
    %vm300 = vcmask 7168
    %v301 = vsel %vm300, %v291, %v297
    %v302 = vsel %vm300, %v293, %v299
    %vm303 = vcmask 15360
    %304 = vst.msk [vmem:[%s8] sm:$0xff] %vm303, %v301
    %305 = vst.msk [vmem:[%s8 + $0x8] sm:$0xff] %vm303, %v302
    // Predicated region
    $region21: #{tpu_custom_call.1} parent=1 // pred_check
      _
    $region22: #{tpu_custom_call.1} parent=1 // pred_check_branch
      %307 = sbr.rel (0) target = $region24
    $region23: #{tpu_custom_call.1} parent=1 // pred_region
      _
    $region24: #{tpu_custom_call.1} parent=1 // pred_fallthru
      _
    // Predicated region
    $region25: #{tpu_custom_call.1} parent=1 // pred_check
      _
    $region26: #{tpu_custom_call.1} parent=1 // pred_check_branch
      %309 = sbr.rel (0) target = $region28
    $region27: #{tpu_custom_call.1} parent=1 // pred_region
      _
    $region28: #{tpu_custom_call.1} parent=1 // pred_fallthru
      _
    %310 = vsyncpa [#allocation12], 1

</llo_original>
